<compile_context>
chip_gen: v5e
topology: v5e:2x2
jax: 0.10.0
libtpu: 0.0.40
codegen_flags: <defaults>
</compile_context>

<pallas_src>
import functools

import jax
import jax.numpy as jnp
from jax import lax
from jax.experimental import pallas as pl
from jax.experimental.pallas import tpu as pltpu


def _attention_kernel(x_ref, wqkv_ref, wo_ref, bo_ref, gamma_ref, beta_ref,
                      o_ref, *, heads, dim_head, eps, matmul_dtype):
    bt, n, d = x_ref.shape            # (batch tile, tokens, dim)
    inner = heads * dim_head
    tokens = bt * n
    g = heads * bt                    # collapsed (head, batch) attention batch

    # ---- LayerNorm over the feature dim (f32 elementwise) ----
    x = x_ref[...].astype(jnp.float32).reshape(tokens, d)
    mean = jnp.mean(x, axis=-1, keepdims=True)
    xc = x - mean
    var = jnp.mean(xc * xc, axis=-1, keepdims=True)
    xn = (xc * lax.rsqrt(var + eps) * gamma_ref[...] + beta_ref[...])
    xn = xn.astype(matmul_dtype)                                    # (tokens, d)

    # ---- fused QKV projection: ONE deep MXU matmul (K = D, 3*inner lanes) ----
    # Softmax scale is pre-folded into the q columns of wqkv (wrapper).
    qkv = jnp.dot(xn, wqkv_ref[...], preferred_element_type=jnp.float32)
    qkv = qkv.astype(matmul_dtype)                                  # (tokens, 3*inner)

    # ---- head split: static lane slices stacked on a new leading axis ----
    # (h-major), then a leading-dim regroup to the (g, n, dh) batched layout.
    def split_heads(col0):
        parts = [qkv[:, col0 + h * dim_head: col0 + (h + 1) * dim_head]
                 for h in range(heads)]                             # (tokens, dh) each
        return jnp.stack(parts, axis=0).reshape(g, n, dim_head)     # g = h*bt + b

    q_g = split_heads(0)
    k_g = split_heads(inner)
    v_g = split_heads(2 * inner)

    # ---- scaled dot-product attention, batched over (head, batch) ----
    dots = jnp.einsum('gnd,gmd->gnm', q_g, k_g,
                      preferred_element_type=jnp.float32)           # (g, n, n) f32
    # TODO(synk): for long sequences (N >~ 512) tile the key axis with an
    # online softmax instead of materializing the full (g, N, N) score tensor.
    m = jnp.max(dots, axis=-1, keepdims=True)
    ex = jnp.exp(dots - m)
    attn = ex * pl.reciprocal(jnp.sum(ex, axis=-1, keepdims=True), approx=True)

    ctx = jnp.einsum('gnm,gmd->gnd', attn.astype(matmul_dtype), v_g,
                     preferred_element_type=jnp.float32)            # (g, n, dh) f32

    # ---- head merge 'b h n d -> b n (h d)': lay heads side-by-side on the
    #      lane axis, then ONE deep output projection (K = inner, Dp lanes) ----
    ctx = ctx.reshape(heads, tokens, dim_head).astype(matmul_dtype)
    ctx = jnp.concatenate([ctx[h] for h in range(heads)], axis=-1)  # (tokens, inner)

    y = jnp.dot(ctx, wo_ref[...], preferred_element_type=jnp.float32)
    y = y + bo_ref[...]                                             # (tokens, Dp) f32
    o_ref[...] = y.reshape(bt, n, -1).astype(o_ref.dtype)


def prepare_attention_params(params, *, heads, dim_head,
                             matmul_dtype=jnp.bfloat16):
    """One-time weight re-layout. Call once per parameter set and reuse."""
    w_qkv = jnp.asarray(params["w_qkv"], jnp.float32)        # (D, 3*inner)
    w_out = jnp.asarray(params["w_out"], jnp.float32)        # (inner, D)
    b_out = jnp.asarray(params["b_out"], jnp.float32).reshape(1, -1)
    gamma = jnp.asarray(params["gamma"], jnp.float32).reshape(1, -1)
    beta = jnp.asarray(params["beta"], jnp.float32).reshape(1, -1)

    D = w_qkv.shape[0]
    inner = heads * dim_head
    assert w_qkv.shape == (D, 3 * inner)
    assert w_out.shape == (inner, D)
    Dp = ((D + 127) // 128) * 128                            # lane-dense output

    # Fold the softmax scale into the q columns (before the bf16 cast).
    scale = float(dim_head) ** -0.5
    w_qkv = w_qkv.at[:, :inner].multiply(scale)

    return {
        "w_qkv": w_qkv.astype(matmul_dtype),                                  # (D, 3*inner)
        "w_out": jnp.pad(w_out, ((0, 0), (0, Dp - D))).astype(matmul_dtype),  # (inner, Dp)
        "b_out": jnp.pad(b_out, ((0, 0), (0, Dp - D))),                       # (1, Dp) f32
        "gamma": gamma,                                                       # (1, D)  f32
        "beta": beta,                                                         # (1, D)  f32
        "dim": int(D),
        "dim_padded": int(Dp),
    }


def attention_pallas(x, prepared, *, heads, dim_head, block_b=None,
                     matmul_dtype=jnp.bfloat16):
    B, N, D = x.shape
    inner = heads * dim_head
    Dp = prepared["dim_padded"]
    assert prepared["dim"] == D

    if block_b is None:
        # Prefer ~4 grid steps (DMA pipelining) and always >= 2 when B allows
        # (v7x megacore); never replicate weights to get there.
        block_b = 1
        for cand in (B // 4, B // 2, 1):
            if cand >= 1 and B % cand == 0:
                block_b = cand
                break
    assert B % block_b == 0
    grid = (B // block_b,)

    kernel = functools.partial(_attention_kernel, heads=heads,
                               dim_head=dim_head, eps=1e-5,
                               matmul_dtype=matmul_dtype)

    def const(shape):
        return pl.BlockSpec(shape, lambda b: (0,) * len(shape))
    # Note: constant-index weight specs could use pipeline_mode=pl.Buffered(1)
    # to drop the pointless second buffer; left at default for portability.

    # Advisory cost estimate so XLA schedules the surrounding graph sensibly.
    flops = (2 * B * N * D * 3 * inner                 # fused QKV projection
             + 2 * B * heads * N * N * dim_head * 2    # scores + context
             + 2 * B * N * inner * Dp)                 # output projection
    bytes_accessed = ((B * N * D + B * N * Dp) * 4
                      + (D * 3 * inner + inner * Dp) * 2
                      + (Dp + 2 * D) * 4)
    cost = pl.CostEstimate(flops=int(flops),
                           transcendentals=int(B * heads * N * N),
                           bytes_accessed=int(bytes_accessed))

    # Rough per-step VMEM footprint -> scoped-VMEM limit (stay <= 64 MiB, v7x).
    g = heads * block_b
    tokens = block_b * N
    est = (2 * block_b * N * (D + Dp) * 4              # x / y tiles (2-deep)
           + 2 * (D * 3 * inner + inner * Dp) * 2      # bf16 weights (2-deep)
           + tokens * (D + 3 * inner) * 4              # xn + qkv
           + 3 * g * N * dim_head * 2                  # q/k/v (bf16)
           + 2 * g * N * N * 4                         # dots + exp (f32)
           + g * N * dim_head * 4 + tokens * (inner * 2 + Dp * 4))
    vmem_limit = int(min(max(2 * est, 32 * 1024 * 1024), 64 * 1024 * 1024))

    y = pl.pallas_call(
        kernel,
        out_shape=jax.ShapeDtypeStruct((B, N, Dp), x.dtype),
        grid_spec=pltpu.PrefetchScalarGridSpec(
            num_scalar_prefetch=0,
            grid=grid,
            in_specs=[
                pl.BlockSpec((block_b, N, D), lambda b: (b, 0, 0)),   # x
                const((D, 3 * inner)),                                # w_qkv
                const((inner, Dp)),                                   # w_out
                const((1, Dp)),                                       # b_out
                const((1, D)),                                        # ln gamma
                const((1, D)),                                        # ln beta
            ],
            out_specs=pl.BlockSpec((block_b, N, Dp), lambda b: (b, 0, 0)),
        ),
        compiler_params=pltpu.CompilerParams(
            dimension_semantics=("parallel",),
            vmem_limit_bytes=vmem_limit),
        cost_estimate=cost,
    )(x, prepared["w_qkv"], prepared["w_out"], prepared["b_out"],
      prepared["gamma"], prepared["beta"])
    return y[..., :D]


def attention_reference(x, params, *, heads, dim_head):
    """Pure-JAX (f32) reference mirroring the PyTorch module (eval mode)."""
    inner = heads * dim_head
    scale = float(dim_head) ** -0.5
    B, N, D = x.shape
    mean = jnp.mean(x, axis=-1, keepdims=True)
    var = jnp.mean((x - mean) ** 2, axis=-1, keepdims=True)
    xn = (x - mean) / jnp.sqrt(var + 1e-5)
    xn = xn * params["gamma"][0] + params["beta"][0]
    qkv = xn @ params["w_qkv"]
    q, k, v = jnp.split(qkv, 3, axis=-1)

    def split_heads(t):  # b n (h d) -> b h n d
        return t.reshape(B, N, heads, dim_head).transpose(0, 2, 1, 3)

    q, k, v = map(split_heads, (q, k, v))
    dots = jnp.einsum("bhnd,bhmd->bhnm", q, k) * scale
    attn = jax.nn.softmax(dots, axis=-1)
    out = jnp.einsum("bhnm,bhmd->bhnd", attn, v)
    out = out.transpose(0, 2, 1, 3).reshape(B, N, inner)
    return out @ params["w_out"] + params["b_out"][0]


if __name__ == "__main__":
    # Small shapes: dim=32, heads=4, dim_head=8 -> inner_dim=32, project_out=True
    B, N, D = 2, 8, 32
    HEADS, DIM_HEAD = 4, 8
    INNER = HEADS * DIM_HEAD

    key = jax.random.PRNGKey(0)
    kx, kqkv, kwo, kbo, kg, kb = jax.random.split(key, 6)

    x = jax.random.normal(kx, (B, N, D), dtype=jnp.float32)
    params = {
        "w_qkv": jax.random.normal(kqkv, (D, 3 * INNER), jnp.float32) * 0.05,
        "w_out": jax.random.normal(kwo, (INNER, D), jnp.float32) * 0.05,
        "b_out": jax.random.normal(kbo, (1, D), jnp.float32) * 0.05,
        "gamma": 1.0 + 0.1 * jax.random.normal(kg, (1, D), jnp.float32),
        "beta": 0.1 * jax.random.normal(kb, (1, D), jnp.float32),
    }

    # One-time weight re-layout (hoisted out of the per-call path).
    prepared = prepare_attention_params(params, heads=HEADS, dim_head=DIM_HEAD)

    out = attention_pallas(x, prepared, heads=HEADS, dim_head=DIM_HEAD)
    out = jax.block_until_ready(out)

    ref = attention_reference(x, params, heads=HEADS, dim_head=DIM_HEAD)
    assert out.shape == (B, N, D)
    err = float(jnp.max(jnp.abs(out - ref)))
    # bf16 MXU inputs (f32 accumulation) -> loosened tolerance vs f32 reference.
    assert err < 2e-2, f"max abs err = {err}"

    print("KERNEL_OK")
</pallas_src>

<mosaic_0001>
module attributes {stable_mosaic.version = 11 : i64} {
  func.func @_attention_kernel(%arg0: i32, %arg1: memref<1x8x32xf32, #tpu.memory_space<vmem>>, %arg2: memref<32x96xbf16, #tpu.memory_space<vmem>>, %arg3: memref<32x128xbf16, #tpu.memory_space<vmem>>, %arg4: memref<1x128xf32, #tpu.memory_space<vmem>>, %arg5: memref<1x32xf32, #tpu.memory_space<vmem>>, %arg6: memref<1x32xf32, #tpu.memory_space<vmem>>, %arg7: memref<1x8x128xf32, #tpu.memory_space<vmem>>) attributes {dimension_semantics = [#tpu.dimension_semantics<parallel>], iteration_bounds = array<i64: 2>, scalar_prefetch = 0 : i64, scratch_operands = 0 : i64, tpu.core_type = #tpu.core_type<tc>, window_params = [{transform_indices = @transform_0, window_bounds = array<i64: 1, 8, 32>}, {pipeline_mode = #tpu.pipeline_mode<synchronous>, transform_indices = @transform_1, window_bounds = array<i64: 32, 96>}, {pipeline_mode = #tpu.pipeline_mode<synchronous>, transform_indices = @transform_2, window_bounds = array<i64: 32, 128>}, {pipeline_mode = #tpu.pipeline_mode<synchronous>, transform_indices = @transform_3, window_bounds = array<i64: 1, 128>}, {pipeline_mode = #tpu.pipeline_mode<synchronous>, transform_indices = @transform_4, window_bounds = array<i64: 1, 32>}, {pipeline_mode = #tpu.pipeline_mode<synchronous>, transform_indices = @transform_5, window_bounds = array<i64: 1, 32>}, {transform_indices = @transform_6, window_bounds = array<i64: 1, 8, 128>}]} {
    %c0 = arith.constant 0 : index
    %c0_0 = arith.constant 0 : index
    %c0_1 = arith.constant 0 : index
    %0 = vector.load %arg1[%c0, %c0_0, %c0_1] : memref<1x8x32xf32, #tpu.memory_space<vmem>>, vector<1x8x32xf32>
    %1 = vector.shape_cast %0 : vector<1x8x32xf32> to vector<8x32xf32>
    %cst = arith.constant dense<0.000000e+00> : vector<8xf32>
    %2 = vector.multi_reduction <add>, %1, %cst [1] : vector<8x32xf32> to vector<8xf32>
    %3 = vector.shape_cast %2 : vector<8xf32> to vector<8x1xf32>
    %cst_2 = arith.constant 3.200000e+01 : f32
    %4 = vector.broadcast %cst_2 : f32 to vector<8x1xf32>
    %5 = arith.divf %3, %4 : vector<8x1xf32>
    %6 = vector.broadcast %5 : vector<8x1xf32> to vector<8x32xf32>
    %7 = arith.subf %1, %6 : vector<8x32xf32>
    %8 = arith.mulf %7, %7 : vector<8x32xf32>
    %cst_3 = arith.constant dense<0.000000e+00> : vector<8xf32>
    %9 = vector.multi_reduction <add>, %8, %cst_3 [1] : vector<8x32xf32> to vector<8xf32>
    %10 = vector.shape_cast %9 : vector<8xf32> to vector<8x1xf32>
    %cst_4 = arith.constant 3.200000e+01 : f32
    %11 = vector.broadcast %cst_4 : f32 to vector<8x1xf32>
    %12 = arith.divf %10, %11 : vector<8x1xf32>
    %cst_5 = arith.constant 9.99999974E-6 : f32
    %13 = vector.broadcast %cst_5 : f32 to vector<8x1xf32>
    %14 = arith.addf %12, %13 : vector<8x1xf32>
    %15 = math.rsqrt %14 : vector<8x1xf32>
    %16 = vector.broadcast %15 : vector<8x1xf32> to vector<8x32xf32>
    %17 = arith.mulf %7, %16 : vector<8x32xf32>
    %c0_6 = arith.constant 0 : index
    %c0_7 = arith.constant 0 : index
    %18 = vector.load %arg5[%c0_6, %c0_7] : memref<1x32xf32, #tpu.memory_space<vmem>>, vector<1x32xf32>
    %19 = vector.broadcast %18 : vector<1x32xf32> to vector<8x32xf32>
    %20 = arith.mulf %17, %19 : vector<8x32xf32>
    %c0_8 = arith.constant 0 : index
    %c0_9 = arith.constant 0 : index
    %21 = vector.load %arg6[%c0_8, %c0_9] : memref<1x32xf32, #tpu.memory_space<vmem>>, vector<1x32xf32>
    %22 = vector.broadcast %21 : vector<1x32xf32> to vector<8x32xf32>
    %23 = arith.addf %20, %22 : vector<8x32xf32>
    %24 = arith.truncf %23 : vector<8x32xf32> to vector<8x32xbf16>
    %c0_10 = arith.constant 0 : index
    %c0_11 = arith.constant 0 : index
    %25 = vector.load %arg2[%c0_10, %c0_11] : memref<32x96xbf16, #tpu.memory_space<vmem>>, vector<32x96xbf16>
    %cst_12 = arith.constant dense<0.000000e+00> : vector<8x96xf32>
    %26 = tpu.matmul %24, %25, %cst_12 {dimension_numbers = #tpu.dot_dimension_numbers<[1], [0], [0], [1], [0, 0, 1, 1], [], []>} : vector<8x32xbf16>, vector<32x96xbf16>, vector<8x96xf32> -> vector<8x96xf32>
    %27 = arith.truncf %26 : vector<8x96xf32> to vector<8x96xbf16>
    %28 = vector.extract_strided_slice %27 {offsets = [0, 0], sizes = [8, 8], strides = [1, 1]} : vector<8x96xbf16> to vector<8x8xbf16>
    %29 = vector.extract_strided_slice %27 {offsets = [0, 8], sizes = [8, 8], strides = [1, 1]} : vector<8x96xbf16> to vector<8x8xbf16>
    %30 = vector.extract_strided_slice %27 {offsets = [0, 16], sizes = [8, 8], strides = [1, 1]} : vector<8x96xbf16> to vector<8x8xbf16>
    %31 = vector.extract_strided_slice %27 {offsets = [0, 24], sizes = [8, 8], strides = [1, 1]} : vector<8x96xbf16> to vector<8x8xbf16>
    %32 = vector.shape_cast %28 : vector<8x8xbf16> to vector<1x8x8xbf16>
    %33 = vector.shape_cast %29 : vector<8x8xbf16> to vector<1x8x8xbf16>
    %34 = vector.shape_cast %30 : vector<8x8xbf16> to vector<1x8x8xbf16>
    %35 = vector.shape_cast %31 : vector<8x8xbf16> to vector<1x8x8xbf16>
    %36 = tpu.concatenate %32, %33, %34, %35 in 0 : vector<1x8x8xbf16>, vector<1x8x8xbf16>, vector<1x8x8xbf16>, vector<1x8x8xbf16> -> vector<4x8x8xbf16>
    %37 = vector.extract_strided_slice %27 {offsets = [0, 32], sizes = [8, 8], strides = [1, 1]} : vector<8x96xbf16> to vector<8x8xbf16>
    %38 = vector.extract_strided_slice %27 {offsets = [0, 40], sizes = [8, 8], strides = [1, 1]} : vector<8x96xbf16> to vector<8x8xbf16>
    %39 = vector.extract_strided_slice %27 {offsets = [0, 48], sizes = [8, 8], strides = [1, 1]} : vector<8x96xbf16> to vector<8x8xbf16>
    %40 = vector.extract_strided_slice %27 {offsets = [0, 56], sizes = [8, 8], strides = [1, 1]} : vector<8x96xbf16> to vector<8x8xbf16>
    %41 = vector.shape_cast %37 : vector<8x8xbf16> to vector<1x8x8xbf16>
    %42 = vector.shape_cast %38 : vector<8x8xbf16> to vector<1x8x8xbf16>
    %43 = vector.shape_cast %39 : vector<8x8xbf16> to vector<1x8x8xbf16>
    %44 = vector.shape_cast %40 : vector<8x8xbf16> to vector<1x8x8xbf16>
    %45 = tpu.concatenate %41, %42, %43, %44 in 0 : vector<1x8x8xbf16>, vector<1x8x8xbf16>, vector<1x8x8xbf16>, vector<1x8x8xbf16> -> vector<4x8x8xbf16>
    %46 = vector.extract_strided_slice %27 {offsets = [0, 64], sizes = [8, 8], strides = [1, 1]} : vector<8x96xbf16> to vector<8x8xbf16>
    %47 = vector.extract_strided_slice %27 {offsets = [0, 72], sizes = [8, 8], strides = [1, 1]} : vector<8x96xbf16> to vector<8x8xbf16>
    %48 = vector.extract_strided_slice %27 {offsets = [0, 80], sizes = [8, 8], strides = [1, 1]} : vector<8x96xbf16> to vector<8x8xbf16>
    %49 = vector.extract_strided_slice %27 {offsets = [0, 88], sizes = [8, 8], strides = [1, 1]} : vector<8x96xbf16> to vector<8x8xbf16>
    %50 = vector.shape_cast %46 : vector<8x8xbf16> to vector<1x8x8xbf16>
    %51 = vector.shape_cast %47 : vector<8x8xbf16> to vector<1x8x8xbf16>
    %52 = vector.shape_cast %48 : vector<8x8xbf16> to vector<1x8x8xbf16>
    %53 = vector.shape_cast %49 : vector<8x8xbf16> to vector<1x8x8xbf16>
    %54 = tpu.concatenate %50, %51, %52, %53 in 0 : vector<1x8x8xbf16>, vector<1x8x8xbf16>, vector<1x8x8xbf16>, vector<1x8x8xbf16> -> vector<4x8x8xbf16>
    "tpu.trace_start"() <{level = 10 : i32, message = "gnd,gmd->gnm"}> : () -> ()
    %cst_13 = arith.constant dense<0.000000e+00> : vector<4x8x8xf32>
    %55 = tpu.matmul %36, %45, %cst_13 {dimension_numbers = #tpu.dot_dimension_numbers<[2], [2], [1], [1], [0, 0, 0, 1, 1, 1], [0], [0]>} : vector<4x8x8xbf16>, vector<4x8x8xbf16>, vector<4x8x8xf32> -> vector<4x8x8xf32>
    "tpu.trace_stop"() : () -> ()
    %cst_14 = arith.constant dense<0xFF800000> : vector<4x8xf32>
    %56 = vector.multi_reduction <maximumf>, %55, %cst_14 [2] : vector<4x8x8xf32> to vector<4x8xf32>
    %57 = vector.shape_cast %56 : vector<4x8xf32> to vector<4x8x1xf32>
    %58 = vector.broadcast %57 : vector<4x8x1xf32> to vector<4x8x8xf32>
    %59 = arith.subf %55, %58 : vector<4x8x8xf32>
    %60 = math.exp %59 : vector<4x8x8xf32>
    %cst_15 = arith.constant dense<0.000000e+00> : vector<4x8xf32>
    %61 = vector.multi_reduction <add>, %60, %cst_15 [2] : vector<4x8x8xf32> to vector<4x8xf32>
    %62 = vector.shape_cast %61 : vector<4x8xf32> to vector<4x8x1xf32>
    %63 = tpu.reciprocal %62 {approx = true} : vector<4x8x1xf32> -> vector<4x8x1xf32>
    %64 = vector.broadcast %63 : vector<4x8x1xf32> to vector<4x8x8xf32>
    %65 = arith.mulf %60, %64 : vector<4x8x8xf32>
    %66 = arith.truncf %65 : vector<4x8x8xf32> to vector<4x8x8xbf16>
    "tpu.trace_start"() <{level = 10 : i32, message = "gnm,gmd->gnd"}> : () -> ()
    %cst_16 = arith.constant dense<0.000000e+00> : vector<4x8x8xf32>
    %67 = tpu.matmul %66, %54, %cst_16 {dimension_numbers = #tpu.dot_dimension_numbers<[2], [1], [1], [2], [0, 0, 0, 1, 1, 2], [0], [0]>} : vector<4x8x8xbf16>, vector<4x8x8xbf16>, vector<4x8x8xf32> -> vector<4x8x8xf32>
    "tpu.trace_stop"() : () -> ()
    %68 = arith.truncf %67 : vector<4x8x8xf32> to vector<4x8x8xbf16>
    %69 = vector.extract_strided_slice %68 {offsets = [0, 0, 0], sizes = [1, 8, 8], strides = [1, 1, 1]} : vector<4x8x8xbf16> to vector<1x8x8xbf16>
    %70 = vector.shape_cast %69 : vector<1x8x8xbf16> to vector<8x8xbf16>
    %71 = vector.extract_strided_slice %68 {offsets = [1, 0, 0], sizes = [1, 8, 8], strides = [1, 1, 1]} : vector<4x8x8xbf16> to vector<1x8x8xbf16>
    %72 = vector.shape_cast %71 : vector<1x8x8xbf16> to vector<8x8xbf16>
    %73 = vector.extract_strided_slice %68 {offsets = [2, 0, 0], sizes = [1, 8, 8], strides = [1, 1, 1]} : vector<4x8x8xbf16> to vector<1x8x8xbf16>
    %74 = vector.shape_cast %73 : vector<1x8x8xbf16> to vector<8x8xbf16>
    %75 = vector.extract_strided_slice %68 {offsets = [3, 0, 0], sizes = [1, 8, 8], strides = [1, 1, 1]} : vector<4x8x8xbf16> to vector<1x8x8xbf16>
    %76 = vector.shape_cast %75 : vector<1x8x8xbf16> to vector<8x8xbf16>
    %77 = tpu.concatenate %70, %72, %74, %76 in 1 : vector<8x8xbf16>, vector<8x8xbf16>, vector<8x8xbf16>, vector<8x8xbf16> -> vector<8x32xbf16>
    %c0_17 = arith.constant 0 : index
    %c0_18 = arith.constant 0 : index
    %78 = vector.load %arg3[%c0_17, %c0_18] : memref<32x128xbf16, #tpu.memory_space<vmem>>, vector<32x128xbf16>
    %cst_19 = arith.constant dense<0.000000e+00> : vector<8x128xf32>
    %79 = tpu.matmul %77, %78, %cst_19 {dimension_numbers = #tpu.dot_dimension_numbers<[1], [0], [0], [1], [0, 0, 1, 1], [], []>} : vector<8x32xbf16>, vector<32x128xbf16>, vector<8x128xf32> -> vector<8x128xf32>
    %c0_20 = arith.constant 0 : index
    %c0_21 = arith.constant 0 : index
    %80 = vector.load %arg4[%c0_20, %c0_21] : memref<1x128xf32, #tpu.memory_space<vmem>>, vector<1x128xf32>
    %81 = vector.broadcast %80 : vector<1x128xf32> to vector<8x128xf32>
    %82 = arith.addf %79, %81 : vector<8x128xf32>
    %83 = vector.shape_cast %82 : vector<8x128xf32> to vector<1x8x128xf32>
    %c0_22 = arith.constant 0 : index
    %c0_23 = arith.constant 0 : index
    %c0_24 = arith.constant 0 : index
    %84 = vector.load %arg7[%c0_22, %c0_23, %c0_24] : memref<1x8x128xf32, #tpu.memory_space<vmem>>, vector<1x8x128xf32>
    tpu.vector_store %arg7[%c0_22, %c0_23, %c0_24], %83 {strides = array<i32>} : memref<1x8x128xf32, #tpu.memory_space<vmem>>, vector<1x8x128xf32>,
    return
  }
  func.func @transform_0(%arg0: i32) -> (i32, i32, i32) {
    %c0_i32 = arith.constant 0 : i32
    %c0_i32_0 = arith.constant 0 : i32
    %c0_i32_1 = arith.constant 0 : i32
    return %arg0, %c0_i32, %c0_i32_0 : i32, i32, i32
  }
  func.func @transform_1(%arg0: i32) -> (i32, i32) {
    %c0_i32 = arith.constant 0 : i32
    %c0_i32_0 = arith.constant 0 : i32
    %c0_i32_1 = arith.constant 0 : i32
    return %c0_i32, %c0_i32_0 : i32, i32
  }
  func.func @transform_2(%arg0: i32) -> (i32, i32) {
    %c0_i32 = arith.constant 0 : i32
    %c0_i32_0 = arith.constant 0 : i32
    %c0_i32_1 = arith.constant 0 : i32
    return %c0_i32, %c0_i32_0 : i32, i32
  }
  func.func @transform_3(%arg0: i32) -> (i32, i32) {
    %c0_i32 = arith.constant 0 : i32
    %c0_i32_0 = arith.constant 0 : i32
    %c0_i32_1 = arith.constant 0 : i32
    return %c0_i32, %c0_i32_0 : i32, i32
  }
  func.func @transform_4(%arg0: i32) -> (i32, i32) {
    %c0_i32 = arith.constant 0 : i32
    %c0_i32_0 = arith.constant 0 : i32
    %c0_i32_1 = arith.constant 0 : i32
    return %c0_i32, %c0_i32_0 : i32, i32
  }
  func.func @transform_5(%arg0: i32) -> (i32, i32) {
    %c0_i32 = arith.constant 0 : i32
    %c0_i32_0 = arith.constant 0 : i32
    %c0_i32_1 = arith.constant 0 : i32
    return %c0_i32, %c0_i32_0 : i32, i32
  }
  func.func @transform_6(%arg0: i32) -> (i32, i32, i32) {
    %c0_i32 = arith.constant 0 : i32
    %c0_i32_0 = arith.constant 0 : i32
    %c0_i32_1 = arith.constant 0 : i32
    return %arg0, %c0_i32, %c0_i32_0 : i32, i32, i32
  }
}

</mosaic_0001>

<llo_original>
// kernel: tpu_custom_call.1
$region0: #{tpu_custom_call.1}
  #allocation0 [shape = 'u32[]', space=smem, size = 0x4, offset = 0x4, fixed_abs, tag = 'smem constant byte address 0x4 - core index']
  #allocation1 [shape = 'u32[72,128]{1,0:T(1,128)}', space=vmem, size = 0x9000, scoped, tag = 'internal scratch']
  %s0 = inlined_call_operand.hbm [shape: f32[2,8,32], index: 0, kind: input, shape index: {}]
  %s1 = inlined_call_operand.hbm [shape: bf16[32,96], index: 1, kind: input, shape index: {}]
  %s2 = inlined_call_operand.hbm [shape: bf16[32,128], index: 2, kind: input, shape index: {}]
  %s3 = inlined_call_operand.vmem [shape: f32[1,128], index: 3, kind: input, shape index: {}]
  %s4 = inlined_call_operand.vmem [shape: f32[1,32], index: 4, kind: input, shape index: {}]
  %s5 = inlined_call_operand.vmem [shape: f32[1,32], index: 5, kind: input, shape index: {}]
  %s6 = inlined_call_operand.hbm [shape: f32[2,8,128], index: 6, kind: output, shape index: {}]
  %s7 = sld [smem:[#allocation0]]
  $region69: #{tpu_custom_call.1} parent=0
    _
  %s9 = ssub.s32 1, %s7
  %s10 = scalar_select 0, %s9, %s7
  $region1: #{tpu_custom_call.1} parent=0
    #allocation2 [shape = 'u8[8192]{0}', space=vmem, size = 0x2000, scoped, tag = 'input window, operand 0']
    #allocation3 [shape = 's32[2]{0}', space=sflag, size = 0x8, scoped, tag = 'scoped memory for tpu_custom_call.1']
    #allocation4 [shape = 's32[2]{0}', space=sflag, size = 0x8, scoped, tag = 'scoped memory for tpu_custom_call.1']
    #allocation5 [shape = 'u8[8192]{0}', space=vmem, size = 0x2000, scoped, tag = 'input window, operand 1, single buffered']
    #allocation6 [shape = 's32[1]{0}', space=sflag, size = 0x4, scoped, tag = 'scoped memory for tpu_custom_call.1']
    #allocation7 [shape = 'u8[8192]{0}', space=vmem, size = 0x2000, scoped, tag = 'input window, operand 2, single buffered']
    #allocation8 [shape = 'u8[8192]{0}', space=vmem, size = 0x2000, scoped, tag = 'output window, operand 0']
    %11 = vsyncpa [#allocation3], 0
    %s12 = scalar_lea.sflag [#allocation3], 1
    %13 = vsyncpa %s12, 0
    %14 = vsyncpa [#allocation6], 0
    %15 = vsyncpa [#allocation4], 0
    %s16 = scalar_lea.sflag [#allocation4], 1
    %17 = vsyncpa %s16, 0
    loop: start=0, step=1, limit=4
    $region2: #{tpu_custom_call.1} parent=1 // loop_pre_header
      _
    $region3: #{tpu_custom_call.1} parent=1 // loop_header
      %s19 = sphi 0, %s23
      %p20 = scmp.ge.s32.totalorder %s19, 4
      %s29 = sphi 0, %s31
      %s32 = sphi 0, %s29
      %s33 = sphi 0, %s32
      %s49 = sphi 0, %s33
      %s53 = sphi 0, %s53
      %s55 = sphi 0, %s53
      %s56 = sphi 0, %s55
      %s70 = sphi 0, %s56
      %s74 = sphi 0, %s74
      %s76 = sphi 0, %s74
      %s77 = sphi 0, %s76
      %s91 = sphi 0, %s77
      %s95 = sphi 0, %s95
      %s97 = sphi 0, %s95
      %s98 = sphi 0, %s97
      %s112 = sphi 0, %s98
      %s116 = sphi 0, %s116
      %s118 = sphi 0, %s116
      %s119 = sphi 0, %s118
      %s133 = sphi 0, %s119
      %s137 = sphi 0, %s137
      %s139 = sphi 0, %s137
      %s140 = sphi 0, %s139
      %s154 = sphi 0, %s140
      %s160 = sphi 0, %s162
      %s163 = sphi 0, %s160
      %s164 = sphi 0, %s163
      %s180 = sphi 0, %s164
    $region4: #{tpu_custom_call.1} parent=1 // loop_header_branch
      %22 = sbr.rel (%p20) target = $region8
    $region5: #{tpu_custom_call.1} parent=1 // loop_body
      %s24 = ssub.s32 %s19, 1
      %s25 = ssub.s32 %s19, 2
      %s26 = sadd.s32 %s19, 1
      %s27 = ssub.s32 %s19, %s26
      %p28 = scmp.eq.s32.totalorder %s27, 0
      %s30 = sadd.s32 %s29, 1
      %s31 = scalar_select %p28, %s29, %s30
      %p34 = pneg %p28
      %p35 = scmp.eq.s32.totalorder %s19, 1
      %p36 = por %p34, %p35
      %p37 = scmp.ne.s32.totalorder %s29, %s32
      %p38 = scmp.eq.s32.totalorder %s19, 0
      %p39 = por %p37, %p38
      %p40 = scmp.ne.s32.totalorder %s29, %s32
      %p41 = scmp.eq.s32.totalorder %s24, 1
      %p42 = por %p40, %p41
      %p43 = scmp.ne.s32.totalorder %s32, %s33
      %p44 = scmp.eq.s32.totalorder %s24, 0
      %p45 = por %p43, %p44
      %p46 = scmp.ne.s32.totalorder %s32, %s33
      %p47 = scmp.eq.s32.totalorder %s25, 1
      %p48 = por %p46, %p47
      %p50 = scmp.ne.s32.totalorder %s33, %s49
      %p51 = scmp.eq.s32.totalorder %s25, 0
      %p52 = por %p50, %p51
      %s54 = sadd.s32 %s53, 1
      %p57 = scmp.eq.s32.totalorder %s19, 1
      %p58 = scmp.ne.s32.totalorder %s53, %s55
      %p59 = scmp.eq.s32.totalorder %s19, 0
      %p60 = por %p58, %p59
      %p61 = scmp.ne.s32.totalorder %s53, %s55
      %p62 = scmp.eq.s32.totalorder %s24, 1
      %p63 = por %p61, %p62
      %p64 = scmp.ne.s32.totalorder %s55, %s56
      %p65 = scmp.eq.s32.totalorder %s24, 0
      %p66 = por %p64, %p65
      %p67 = scmp.ne.s32.totalorder %s55, %s56
      %p68 = scmp.eq.s32.totalorder %s25, 1
      %p69 = por %p67, %p68
      %p71 = scmp.ne.s32.totalorder %s56, %s70
      %p72 = scmp.eq.s32.totalorder %s25, 0
      %p73 = por %p71, %p72
      %s75 = sadd.s32 %s74, 1
      %p78 = scmp.eq.s32.totalorder %s19, 1
      %p79 = scmp.ne.s32.totalorder %s74, %s76
      %p80 = scmp.eq.s32.totalorder %s19, 0
      %p81 = por %p79, %p80
      %p82 = scmp.ne.s32.totalorder %s74, %s76
      %p83 = scmp.eq.s32.totalorder %s24, 1
      %p84 = por %p82, %p83
      %p85 = scmp.ne.s32.totalorder %s76, %s77
      %p86 = scmp.eq.s32.totalorder %s24, 0
      %p87 = por %p85, %p86
      %p88 = scmp.ne.s32.totalorder %s76, %s77
      %p89 = scmp.eq.s32.totalorder %s25, 1
      %p90 = por %p88, %p89
      %p92 = scmp.ne.s32.totalorder %s77, %s91
      %p93 = scmp.eq.s32.totalorder %s25, 0
      %p94 = por %p92, %p93
      %s96 = sadd.s32 %s95, 1
      %p99 = scmp.eq.s32.totalorder %s19, 1
      %p100 = scmp.ne.s32.totalorder %s95, %s97
      %p101 = scmp.eq.s32.totalorder %s19, 0
      %p102 = por %p100, %p101
      %p103 = scmp.ne.s32.totalorder %s95, %s97
      %p104 = scmp.eq.s32.totalorder %s24, 1
      %p105 = por %p103, %p104
      %p106 = scmp.ne.s32.totalorder %s97, %s98
      %p107 = scmp.eq.s32.totalorder %s24, 0
      %p108 = por %p106, %p107
      %p109 = scmp.ne.s32.totalorder %s97, %s98
      %p110 = scmp.eq.s32.totalorder %s25, 1
      %p111 = por %p109, %p110
      %p113 = scmp.ne.s32.totalorder %s98, %s112
      %p114 = scmp.eq.s32.totalorder %s25, 0
      %p115 = por %p113, %p114
      %s117 = sadd.s32 %s116, 1
      %p120 = scmp.eq.s32.totalorder %s19, 1
      %p121 = scmp.ne.s32.totalorder %s116, %s118
      %p122 = scmp.eq.s32.totalorder %s19, 0
      %p123 = por %p121, %p122
      %p124 = scmp.ne.s32.totalorder %s116, %s118
      %p125 = scmp.eq.s32.totalorder %s24, 1
      %p126 = por %p124, %p125
      %p127 = scmp.ne.s32.totalorder %s118, %s119
      %p128 = scmp.eq.s32.totalorder %s24, 0
      %p129 = por %p127, %p128
      %p130 = scmp.ne.s32.totalorder %s118, %s119
      %p131 = scmp.eq.s32.totalorder %s25, 1
      %p132 = por %p130, %p131
      %p134 = scmp.ne.s32.totalorder %s119, %s133
      %p135 = scmp.eq.s32.totalorder %s25, 0
      %p136 = por %p134, %p135
      %s138 = sadd.s32 %s137, 1
      %p141 = scmp.eq.s32.totalorder %s19, 1
      %p142 = scmp.ne.s32.totalorder %s137, %s139
      %p143 = scmp.eq.s32.totalorder %s19, 0
      %p144 = por %p142, %p143
      %p145 = scmp.ne.s32.totalorder %s137, %s139
      %p146 = scmp.eq.s32.totalorder %s24, 1
      %p147 = por %p145, %p146
      %p148 = scmp.ne.s32.totalorder %s139, %s140
      %p149 = scmp.eq.s32.totalorder %s24, 0
      %p150 = por %p148, %p149
      %p151 = scmp.ne.s32.totalorder %s139, %s140
      %p152 = scmp.eq.s32.totalorder %s25, 1
      %p153 = por %p151, %p152
      %p155 = scmp.ne.s32.totalorder %s140, %s154
      %p156 = scmp.eq.s32.totalorder %s25, 0
      %p157 = por %p155, %p156
      %s158 = ssub.s32 %s19, %s26
      %p159 = scmp.eq.s32.totalorder %s158, 0
      %s161 = sadd.s32 %s160, 1
      %s162 = scalar_select %p159, %s160, %s161
      %p165 = pneg %p159
      %p166 = scmp.eq.s32.totalorder %s19, 1
      %p167 = por %p165, %p166
      %p168 = scmp.ne.s32.totalorder %s160, %s163
      %p169 = scmp.eq.s32.totalorder %s19, 0
      %p170 = por %p168, %p169
      %p171 = scmp.ne.s32.totalorder %s160, %s163
      %p172 = scmp.eq.s32.totalorder %s24, 1
      %p173 = por %p171, %p172
      %p174 = scmp.ne.s32.totalorder %s163, %s164
      %p175 = scmp.eq.s32.totalorder %s24, 0
      %p176 = por %p174, %p175
      %p177 = scmp.ne.s32.totalorder %s163, %s164
      %p178 = scmp.eq.s32.totalorder %s25, 1
      %p179 = por %p177, %p178
      %p181 = scmp.ne.s32.totalorder %s164, %s180
      %p182 = scmp.eq.s32.totalorder %s25, 0
      %p183 = por %p181, %p182
      %p184 = scmp.le.s32.totalorder 1, %s19
      %p185 = scmp.lt.s32.totalorder %s19, 3
      %p186 = pnand %p184, %p185
      %p187 = pneg %p186
      // Predicated region
      $region9: #{tpu_custom_call.1} parent=5 // pred_check
        _
      $region10: #{tpu_custom_call.1} parent=5 // pred_check_branch
        %189 = sbr.rel (%p186) target = $region12
      $region11: #{tpu_custom_call.1} parent=5 // pred_region
        %s190 = ssub.s32 %s19, 1
        // Predicated region
        $region13: #{tpu_custom_call.1} parent=11 // pred_check
          %p191 = pneg %p66
        $region14: #{tpu_custom_call.1} parent=11 // pred_check_branch
          %193 = sbr.rel (%p191) target = $region16
        $region15: #{tpu_custom_call.1} parent=11 // pred_region
          %195 = vsyncadd [#allocation6], 0
          %s196 = sshll.u32 %s1, 4
          %s197 = int_to_ptr.hbm [resolvable:$true] %s196
          %s198 = sshll.u32 [#allocation5], 4
          %s199 = int_to_ptr.vmem [resolvable:$true] %s198
          %204 = dma.hbm_to_vmem [thread:$0]  %s197, 256, %s199, [#allocation6], 64, 64, 4
        $region16: #{tpu_custom_call.1} parent=11 // pred_fallthru
          _
        // Predicated region
        $region17: #{tpu_custom_call.1} parent=11 // pred_check
          %p205 = pneg %p87
        $region18: #{tpu_custom_call.1} parent=11 // pred_check_branch
          %207 = sbr.rel (%p205) target = $region20
        $region19: #{tpu_custom_call.1} parent=11 // pred_region
          %209 = vsyncadd [#allocation6], 0
          %s210 = sshll.u32 %s2, 4
          %s211 = int_to_ptr.hbm [resolvable:$true] %s210
          %s212 = sshll.u32 [#allocation7], 4
          %s213 = int_to_ptr.vmem [resolvable:$true] %s212
          %218 = dma.hbm_to_vmem [thread:$0]  %s211, 256, %s213, [#allocation6], 64, 64, 4
        $region20: #{tpu_custom_call.1} parent=11 // pred_fallthru
          _
        // Predicated region
        $region21: #{tpu_custom_call.1} parent=11 // pred_check
          %p219 = pneg %p108
        $region22: #{tpu_custom_call.1} parent=11 // pred_check_branch
          %221 = sbr.rel (%p219) target = $region24
        $region23: #{tpu_custom_call.1} parent=11 // pred_region
          _
        $region24: #{tpu_custom_call.1} parent=11 // pred_fallthru
          _
        // Predicated region
        $region25: #{tpu_custom_call.1} parent=11 // pred_check
          %p222 = pneg %p129
        $region26: #{tpu_custom_call.1} parent=11 // pred_check_branch
          %224 = sbr.rel (%p222) target = $region28
        $region27: #{tpu_custom_call.1} parent=11 // pred_region
          _
        $region28: #{tpu_custom_call.1} parent=11 // pred_fallthru
          _
        // Predicated region
        $region29: #{tpu_custom_call.1} parent=11 // pred_check
          %p225 = pneg %p150
        $region30: #{tpu_custom_call.1} parent=11 // pred_check_branch
          %227 = sbr.rel (%p225) target = $region32
        $region31: #{tpu_custom_call.1} parent=11 // pred_region
          _
        $region32: #{tpu_custom_call.1} parent=11 // pred_fallthru
          _
      $region12: #{tpu_custom_call.1} parent=5 // pred_fallthru
        _
      %p228 = scmp.lt.s32.totalorder %s19, 2
      // Predicated region
      $region33: #{tpu_custom_call.1} parent=5 // pred_check
        %p229 = pneg %p228
      $region34: #{tpu_custom_call.1} parent=5 // pred_check_branch
        %231 = sbr.rel (%p229) target = $region36
      $region35: #{tpu_custom_call.1} parent=5 // pred_region
        // Predicated region
        $region37: #{tpu_custom_call.1} parent=35 // pred_check
          %p232 = pneg %p39
        $region38: #{tpu_custom_call.1} parent=35 // pred_check_branch
          %234 = sbr.rel (%p232) target = $region40
        $region39: #{tpu_custom_call.1} parent=35 // pred_region
          %s235 = sand.u32 %s29, 1
          %s236 = scalar_lea.sflag [#allocation3], %s235
          %s237 = sand.u32 %s29, 1
          %s238 = smul.addr %s237, 8
          %s239 = scalar_lea.vmem [#allocation2], %s238
          %241 = vsyncadd %s236, 0
          %s242 = smul.addr %s19, 8
          %s243 = scalar_lea.hbm %s0, %s242
          %s245 = sshll.u32 %s243, 4
          %s246 = int_to_ptr.hbm [resolvable:$true] %s245
          %s247 = sshll.u32 %s239, 4
          %s248 = int_to_ptr.vmem [resolvable:$true] %s247
          %250 = dma.hbm_to_vmem [thread:$0]  %s246, 128, %s248, %s236
        $region40: #{tpu_custom_call.1} parent=35 // pred_fallthru
          _
      $region36: #{tpu_custom_call.1} parent=5 // pred_fallthru
        _
      %p251 = scmp.le.s32.totalorder 1, %s19
      %p252 = scmp.lt.s32.totalorder %s19, 3
      %p253 = pnand %p251, %p252
      %p254 = pneg %p253
      // Predicated region
      $region41: #{tpu_custom_call.1} parent=5 // pred_check
        _
      $region42: #{tpu_custom_call.1} parent=5 // pred_check_branch
        %256 = sbr.rel (%p253) target = $region44
      $region43: #{tpu_custom_call.1} parent=5 // pred_region
        %s257 = ssub.s32 %s19, 1
        %s258 = sand.u32 %s32, 1
        %s259 = scalar_lea.sflag [#allocation3], %s258
        %s260 = sand.u32 %s32, 1
        %s261 = smul.addr %s260, 8
        %s262 = scalar_lea.vmem [#allocation2], %s261
        // Predicated region
        $region45: #{tpu_custom_call.1} parent=43 // pred_check
          %p263 = pneg %p45
        $region46: #{tpu_custom_call.1} parent=43 // pred_check_branch
          %265 = sbr.rel (%p263) target = $region48
        $region47: #{tpu_custom_call.1} parent=43 // pred_region
          %267 = dma.done %s259, 128
        $region48: #{tpu_custom_call.1} parent=43 // pred_fallthru
          _
        // Predicated region
        $region49: #{tpu_custom_call.1} parent=43 // pred_check
          %p268 = pneg %p66
        $region50: #{tpu_custom_call.1} parent=43 // pred_check_branch
          %270 = sbr.rel (%p268) target = $region52
        $region51: #{tpu_custom_call.1} parent=43 // pred_region
          %272 = dma.done [#allocation6], 256
        $region52: #{tpu_custom_call.1} parent=43 // pred_fallthru
          _
        // Predicated region
        $region53: #{tpu_custom_call.1} parent=43 // pred_check
          %p273 = pneg %p87
        $region54: #{tpu_custom_call.1} parent=43 // pred_check_branch
          %275 = sbr.rel (%p273) target = $region56
        $region55: #{tpu_custom_call.1} parent=43 // pred_region
          %277 = dma.done [#allocation6], 256
        $region56: #{tpu_custom_call.1} parent=43 // pred_fallthru
          _
        %s278 = sand.u32 %s32, 1
        %s279 = scalar_lea.sflag [#allocation3], %s278
        %s280 = sand.u32 %s32, 1
        %s281 = smul.addr %s280, 8
        %s282 = scalar_lea.vmem [#allocation2], %s281
        %p283 = pneg %p45
        %p284 = pneg %p42
        %p285 = pneg %p66
        %p286 = pneg %p63
        %p287 = pneg %p87
        %p288 = pneg %p84
        %p289 = pneg %p108
        %p290 = pneg %p105
        %p291 = pneg %p129
        %p292 = pneg %p126
        %p293 = pneg %p150
        %p294 = pneg %p147
        %p295 = pneg %p176
        %p296 = pneg %p173
        %s297 = sand.u32 %s163, 1
        %s298 = scalar_lea.sflag [#allocation4], %s297
        %s299 = sand.u32 %s163, 1
        %s300 = smul.addr %s299, 8
        %s301 = scalar_lea.vmem [#allocation8], %s300
        %v303 = vld [vmem:[%s262] sm:$0xff]
        %vm304 = vcmask 261120
        %v305 = vsel %vm304, %v303, 0.0
        %306 = vadd.xlane.f32.xlu0 %v305
        %v307 = vpop.xlane.xlu0 %306
        %v308 = vrcp.pop 32.0
        %v309 = vmul.f32 32.0, %v308
        %v310 = vsub.f32 1.0, %v309
        %v311 = vmul.f32 %v308, %v310
        %v312 = vadd.f32 %v308, %v311
        %vm313 = vweird.f32 %v308
        %v314 = vsel %vm313, %v308, %v312
        %v315 = vmul.f32 %v307, %v314
        %v316 = vsub.f32 %v303, %v315
        %v317 = vmul.f32 %v316, %v316
        %v318 = vsel %vm304, %v317, 0.0
        %319 = vadd.xlane.f32.xlu0 %v318
        %v320 = vpop.xlane.xlu0 %319
        %v321 = vmul.f32 %v320, %v314
        %v322 = vadd.f32 %v321, 1e-05
        %v323 = vrsqrt.pop %v322
        %v324 = vmul.f32 %v323, %v322
        %v325 = vmul.f32 %v324, %v323
        %v326 = vmul.f32 0.5, %v325
        %v327 = vsub.f32 1.5, %v326
        %v328 = vmul.f32 %v323, %v327
        %vm329 = vweird.f32 %v322
        %vm330 = vweird.f32 %v323
        %vm331 = vmor %vm329, %vm330
        %v332 = vsel %vm331, %v323, %v328
        %v333 = vmul.f32 %v316, %v332
        %v334 = vld [vmem:[%s4] sm:$0x1]
        %v336 = vperm.slane %v334, 0
        %v338 = vmul.f32 %v333, %v336
        %v339 = vld [vmem:[%s5] sm:$0x1]
        %v341 = vperm.slane %v339, 0
        %v343 = vadd.f32 %v338, %v341
        %v344 = vpack.c.bf16 %v343, %v343
        %v345 = vld [vmem:[#allocation5] sm:$0xf]
        %v346 = vld [vmem:[#allocation5 + $0x4] sm:$0xf]
        %v347 = vld [vmem:[#allocation5 + $0x8] sm:$0xf]
        %v348 = vld [vmem:[#allocation5 + $0xc] sm:$0xf]
        %v353 = vunpack.c.l.b16 %v345
        %v354 = vunpack.c.l.b16 %v346
        %v355 = vunpack.c.l.b16 %v347
        %v356 = vunpack.c.l.b16 %v348
        %v357 = vpack.c.b16 %v354, %v353
        %v358 = vpack.c.b16 %v356, %v355
        %v362 = vsel %vm304, %v344, 0
        %364 = vmatpush.bf16.msra.mxu0 0
        %365 = vmatpush.bf16.msra.mxu0 0
        %366 = vmatpush.bf16.msra.mxu0 0
        %367 = vmatpush.bf16.msra.mxu0 0
        %368 = vmatpush.bf16.msra.mxu0 0
        %369 = vmatpush.bf16.msra.mxu0 0
        %370 = vmatpush.bf16.msra.mxu0 %v358
        %371 = vmatpush.bf16.msra.mxu0 %v357
        %372 = vmatmul.bf16.gmra.mxu0 %v362
        %v373 = vpop.f32.mrf.mxu0
        %v374 = vadd.f32 0.0, %v373
        %v375 = vpop.f32.mrf.mxu0
        %376 = vdwg.mxu0
        %v377 = vpack.c.bf16 %v374, %v374
        %379 = vrot.lane.b32.xlu0 %v377, 120
        %v380 = vpop.permute.xlu0 %379
        %381 = vrot.lane.b32.xlu0 %v377, 112
        %v382 = vpop.permute.xlu0 %381
        %383 = vrot.lane.b32.xlu0 %v377, 104
        %v384 = vpop.permute.xlu0 %383
        %v385 = vunpack.c.l.b16 %v377
        %v386 = vpack.c.b16 %v385, %v385
        %387 = vrot.lane.b32.xlu0 %v386, 96
        %v388 = vpop.permute.xlu0 %387
        %vm389 = vcmask 64512
        %v391 = vsel %vm389, %v377, 0
        %v394 = vsel %vm389, %v388, 0
        %396 = vmatpush.bf16.xpose.msra.mxu0 0
        %397 = vmatpush.bf16.xpose.msra.mxu0 0
        %398 = vmatpush.bf16.xpose.msra.mxu0 0
        %399 = vmatpush.bf16.xpose.msra.mxu0 0
        %400 = vmatpush.bf16.xpose.msra.mxu0 0
        %401 = vmatpush.bf16.xpose.msra.mxu0 0
        %402 = vmatpush.bf16.xpose.msra.mxu0 0
        %403 = vmatpush.bf16.xpose.msra.mxu0 %v394
        %404 = vmatmul.bf16.gmra.mxu0 %v391
        %v405 = vpop.f32.mrf.mxu0
        %v406 = vadd.f32 0.0, %v405
        %v407 = vpop.f32.mrf.mxu0
        %408 = vdwg.mxu0
        %v409 = vunpack.c.l.b16 %v380
        %v410 = vpack.c.b16 %v409, %v409
        %411 = vrot.lane.b32.xlu0 %v410, 96
        %v412 = vpop.permute.xlu0 %411
        %v414 = vsel %vm389, %v380, 0
        %v417 = vsel %vm389, %v412, 0
        %419 = vmatpush.bf16.xpose.msra.mxu0 0
        %420 = vmatpush.bf16.xpose.msra.mxu0 0
        %421 = vmatpush.bf16.xpose.msra.mxu0 0
        %422 = vmatpush.bf16.xpose.msra.mxu0 0
        %423 = vmatpush.bf16.xpose.msra.mxu0 0
        %424 = vmatpush.bf16.xpose.msra.mxu0 0
        %425 = vmatpush.bf16.xpose.msra.mxu0 0
        %426 = vmatpush.bf16.xpose.msra.mxu0 %v417
        %427 = vmatmul.bf16.gmra.mxu0 %v414
        %v428 = vpop.f32.mrf.mxu0
        %v429 = vadd.f32 0.0, %v428
        %v430 = vpop.f32.mrf.mxu0
        %431 = vdwg.mxu0
        %v432 = vunpack.c.l.b16 %v382
        %v433 = vpack.c.b16 %v432, %v432
        %434 = vrot.lane.b32.xlu0 %v433, 96
        %v435 = vpop.permute.xlu0 %434
        %v437 = vsel %vm389, %v382, 0
        %v440 = vsel %vm389, %v435, 0
        %442 = vmatpush.bf16.xpose.msra.mxu0 0
        %443 = vmatpush.bf16.xpose.msra.mxu0 0
        %444 = vmatpush.bf16.xpose.msra.mxu0 0
        %445 = vmatpush.bf16.xpose.msra.mxu0 0
        %446 = vmatpush.bf16.xpose.msra.mxu0 0
        %447 = vmatpush.bf16.xpose.msra.mxu0 0
        %448 = vmatpush.bf16.xpose.msra.mxu0 0
        %449 = vmatpush.bf16.xpose.msra.mxu0 %v440
        %450 = vmatmul.bf16.gmra.mxu0 %v437
        %v451 = vpop.f32.mrf.mxu0
        %v452 = vadd.f32 0.0, %v451
        %v453 = vpop.f32.mrf.mxu0
        %454 = vdwg.mxu0
        %v455 = vunpack.c.l.b16 %v384
        %v456 = vpack.c.b16 %v455, %v455
        %457 = vrot.lane.b32.xlu0 %v456, 96
        %v458 = vpop.permute.xlu0 %457
        %v460 = vsel %vm389, %v384, 0
        %v463 = vsel %vm389, %v458, 0
        %465 = vmatpush.bf16.xpose.msra.mxu0 0
        %466 = vmatpush.bf16.xpose.msra.mxu0 0
        %467 = vmatpush.bf16.xpose.msra.mxu0 0
        %468 = vmatpush.bf16.xpose.msra.mxu0 0
        %469 = vmatpush.bf16.xpose.msra.mxu0 0
        %470 = vmatpush.bf16.xpose.msra.mxu0 0
        %471 = vmatpush.bf16.xpose.msra.mxu0 0
        %472 = vmatpush.bf16.xpose.msra.mxu0 %v463
        %473 = vmatmul.bf16.gmra.mxu0 %v460
        %v474 = vpop.f32.mrf.mxu0
        %v475 = vadd.f32 0.0, %v474
        %v476 = vpop.f32.mrf.mxu0
        %477 = vdwg.mxu0
        %v478 = vsel %vm389, %v406, -inf
        %479 = vmax.xlane.f32.xlu0 %v478
        %v480 = vpop.xlane.xlu0 %479
        %v481 = vsel %vm389, %v429, -inf
        %482 = vmax.xlane.f32.xlu0 %v481
        %v483 = vpop.xlane.xlu0 %482
        %v484 = vsel %vm389, %v452, -inf
        %485 = vmax.xlane.f32.xlu0 %v484
        %v486 = vpop.xlane.xlu0 %485
        %v487 = vsel %vm389, %v475, -inf
        %488 = vmax.xlane.f32.xlu0 %v487
        %v489 = vpop.xlane.xlu0 %488
        %v490 = vsub.f32 %v406, %v480
        %v491 = vsub.f32 %v429, %v483
        %v492 = vsub.f32 %v452, %v486
        %v493 = vsub.f32 %v475, %v489
        %v494 = vmul.f32 %v490, 1.442695
        %v495 = vpow.pop %v494
        %v496 = vmul.f32 %v491, 1.442695
        %v497 = vpow.pop %v496
        %v498 = vmul.f32 %v492, 1.442695
        %v499 = vpow.pop %v498
        %v500 = vmul.f32 %v493, 1.442695
        %v501 = vpow.pop %v500
        %v502 = vsel %vm389, %v495, 0.0
        %503 = vadd.xlane.f32.xlu0 %v502
        %v504 = vpop.xlane.xlu0 %503
        %v505 = vsel %vm389, %v497, 0.0
        %506 = vadd.xlane.f32.xlu0 %v505
        %v507 = vpop.xlane.xlu0 %506
        %v508 = vsel %vm389, %v499, 0.0
        %509 = vadd.xlane.f32.xlu0 %v508
        %v510 = vpop.xlane.xlu0 %509
        %v511 = vsel %vm389, %v501, 0.0
        %512 = vadd.xlane.f32.xlu0 %v511
        %v513 = vpop.xlane.xlu0 %512
        %v514 = vrcp.pop %v504
        %v515 = vrcp.pop %v507
        %v516 = vrcp.pop %v510
        %v517 = vrcp.pop %v513
        %v518 = vmul.f32 %v495, %v514
        %v519 = vmul.f32 %v497, %v515
        %v520 = vmul.f32 %v499, %v516
        %v521 = vmul.f32 %v501, %v517
        %v522 = vpack.c.bf16 %v518, %v518
        %v523 = vpack.c.bf16 %v519, %v519
        %v524 = vpack.c.bf16 %v520, %v520
        %v525 = vpack.c.bf16 %v521, %v521
        %526 = vrot.lane.b32.xlu0 %v386, 64
        %v527 = vpop.permute.xlu0 %526
        %v529 = vsel %vm389, %v522, 0
        %vm531 = vcmask 1043456
        %v533 = vsel %vm531, %v527, 0
        %535 = vmatpush.bf16.msra.mxu0 0
        %536 = vmatpush.bf16.msra.mxu0 0
        %537 = vmatpush.bf16.msra.mxu0 0
        %538 = vmatpush.bf16.msra.mxu0 0
        %539 = vmatpush.bf16.msra.mxu0 0
        %540 = vmatpush.bf16.msra.mxu0 0
        %541 = vmatpush.bf16.msra.mxu0 0
        %542 = vmatpush.bf16.msra.mxu0 %v533
        %543 = vmatmul.bf16.gmra.mxu0 %v529
        %v544 = vpop.f32.mrf.mxu0
        %v545 = vadd.f32 0.0, %v544
        %v546 = vpop.f32.mrf.mxu0
        %547 = vdwg.mxu0
        %548 = vrot.lane.b32.xlu0 %v410, 64
        %v549 = vpop.permute.xlu0 %548
        %v551 = vsel %vm389, %v523, 0
        %v554 = vsel %vm531, %v549, 0
        %556 = vmatpush.bf16.msra.mxu0 0
        %557 = vmatpush.bf16.msra.mxu0 0
        %558 = vmatpush.bf16.msra.mxu0 0
        %559 = vmatpush.bf16.msra.mxu0 0
        %560 = vmatpush.bf16.msra.mxu0 0
        %561 = vmatpush.bf16.msra.mxu0 0
        %562 = vmatpush.bf16.msra.mxu0 0
        %563 = vmatpush.bf16.msra.mxu0 %v554
        %564 = vmatmul.bf16.gmra.mxu0 %v551
        %v565 = vpop.f32.mrf.mxu0
        %v566 = vadd.f32 0.0, %v565
        %v567 = vpop.f32.mrf.mxu0
        %568 = vdwg.mxu0
        %569 = vrot.lane.b32.xlu0 %v433, 64
        %v570 = vpop.permute.xlu0 %569
        %v572 = vsel %vm389, %v524, 0
        %v575 = vsel %vm531, %v570, 0
        %577 = vmatpush.bf16.msra.mxu0 0
        %578 = vmatpush.bf16.msra.mxu0 0
        %579 = vmatpush.bf16.msra.mxu0 0
        %580 = vmatpush.bf16.msra.mxu0 0
        %581 = vmatpush.bf16.msra.mxu0 0
        %582 = vmatpush.bf16.msra.mxu0 0
        %583 = vmatpush.bf16.msra.mxu0 0
        %584 = vmatpush.bf16.msra.mxu0 %v575
        %585 = vmatmul.bf16.gmra.mxu0 %v572
        %v586 = vpop.f32.mrf.mxu0
        %v587 = vadd.f32 0.0, %v586
        %v588 = vpop.f32.mrf.mxu0
        %589 = vdwg.mxu0
        %590 = vrot.lane.b32.xlu0 %v456, 64
        %v591 = vpop.permute.xlu0 %590
        %v593 = vsel %vm389, %v525, 0
        %v596 = vsel %vm531, %v591, 0
        %598 = vmatpush.bf16.msra.mxu0 0
        %599 = vmatpush.bf16.msra.mxu0 0
        %600 = vmatpush.bf16.msra.mxu0 0
        %601 = vmatpush.bf16.msra.mxu0 0
        %602 = vmatpush.bf16.msra.mxu0 0
        %603 = vmatpush.bf16.msra.mxu0 0
        %604 = vmatpush.bf16.msra.mxu0 0
        %605 = vmatpush.bf16.msra.mxu0 %v596
        %606 = vmatmul.bf16.gmra.mxu0 %v593
        %v607 = vpop.f32.mrf.mxu0
        %v608 = vadd.f32 0.0, %v607
        %v609 = vpop.f32.mrf.mxu0
        %610 = vdwg.mxu0
        %v611 = vpack.c.bf16 %v545, %v545
        %v612 = vpack.c.bf16 %v566, %v566
        %v613 = vpack.c.bf16 %v587, %v587
        %v614 = vpack.c.bf16 %v608, %v608
        %v616 = vunpack.c.l.b16 %v612
        %v617 = vpack.c.b16 %v616, %v616
        %618 = vrot.lane.b32.xlu0 %v617, 8
        %v619 = vpop.permute.xlu0 %618
        %v621 = vunpack.c.l.b16 %v613
        %v622 = vpack.c.b16 %v621, %v621
        %623 = vrot.lane.b32.xlu0 %v622, 16
        %v624 = vpop.permute.xlu0 %623
        %v626 = vunpack.c.l.b16 %v614
        %v627 = vpack.c.b16 %v626, %v626
        %628 = vrot.lane.b32.xlu0 %v627, 24
        %v629 = vpop.permute.xlu0 %628
        %v632 = vsel %vm389, %v611, %v619
        %vm633 = vcmask 130048
        %v635 = vsel %vm633, %v632, %v624
        %vm636 = vcmask 195584
        %v638 = vsel %vm636, %v635, %v629
        %v639 = vld [vmem:[#allocation7] sm:$0xf]
        %v640 = vld [vmem:[#allocation7 + $0x4] sm:$0xf]
        %v641 = vld [vmem:[#allocation7 + $0x8] sm:$0xf]
        %v642 = vld [vmem:[#allocation7 + $0xc] sm:$0xf]
        %v643 = vld [vmem:[%s3] sm:$0x1]
        %v645 = vperm.slane %v643, 0
        %v651 = vunpack.c.l.b16 %v639
        %v652 = vunpack.c.l.b16 %v640
        %v653 = vunpack.c.l.b16 %v641
        %v654 = vunpack.c.l.b16 %v642
        %v655 = vpack.c.b16 %v652, %v651
        %v656 = vpack.c.b16 %v654, %v653
        %v659 = vsel %vm304, %v638, 0
        %661 = vmatpush.bf16.msra.mxu0 0
        %662 = vmatpush.bf16.msra.mxu0 0
        %663 = vmatpush.bf16.msra.mxu0 0
        %664 = vmatpush.bf16.msra.mxu0 0
        %665 = vmatpush.bf16.msra.mxu0 0
        %666 = vmatpush.bf16.msra.mxu0 0
        %667 = vmatpush.bf16.msra.mxu0 %v656
        %668 = vmatpush.bf16.msra.mxu0 %v655
        %669 = vmatmul.bf16.gmra.mxu0 %v659
        %v670 = vpop.f32.mrf.mxu0
        %v671 = vadd.f32 %v645, %v670
        %v672 = vpop.f32.mrf.mxu0
        %673 = vdwg.mxu0
        %674 = vst [vmem:[%s301] sm:$0xff] %v671
        %s675 = sand.u32 %s163, 1
        %s676 = scalar_lea.sflag [#allocation4], %s675
        %s677 = sand.u32 %s163, 1
        %s678 = smul.addr %s677, 8
        %s679 = scalar_lea.vmem [#allocation8], %s678
        // Predicated region
        $region57: #{tpu_custom_call.1} parent=43 // pred_check
          %p680 = pneg %p173
        $region58: #{tpu_custom_call.1} parent=43 // pred_check_branch
          %682 = sbr.rel (%p680) target = $region60
        $region59: #{tpu_custom_call.1} parent=43 // pred_region
          %684 = vsyncadd %s676, 0
          %s685 = smul.addr %s24, 8
          %s686 = scalar_lea.hbm %s6, %s685
          %s688 = sshll.u32 %s679, 4
          %s689 = int_to_ptr.vmem [resolvable:$true] %s688
          %s690 = sshll.u32 %s686, 4
          %s691 = int_to_ptr.hbm [resolvable:$true] %s690
          %693 = dma.vmem_to_hbm [thread:$0]  %s689, 128, %s691, %s676
        $region60: #{tpu_custom_call.1} parent=43 // pred_fallthru
          _
      $region44: #{tpu_custom_call.1} parent=5 // pred_fallthru
        _
      %p694 = scmp.le.s32.totalorder 2, %s19
      // Predicated region
      $region61: #{tpu_custom_call.1} parent=5 // pred_check
        %p695 = pneg %p694
      $region62: #{tpu_custom_call.1} parent=5 // pred_check_branch
        %697 = sbr.rel (%p695) target = $region64
      $region63: #{tpu_custom_call.1} parent=5 // pred_region
        %s698 = ssub.s32 %s19, 2
        // Predicated region
        $region65: #{tpu_custom_call.1} parent=63 // pred_check
          %p699 = pneg %p179
        $region66: #{tpu_custom_call.1} parent=63 // pred_check_branch
          %701 = sbr.rel (%p699) target = $region68
        $region67: #{tpu_custom_call.1} parent=63 // pred_region
          %s702 = sand.u32 %s164, 1
          %s703 = scalar_lea.sflag [#allocation4], %s702
          %s704 = sand.u32 %s164, 1
          %s705 = smul.addr %s704, 8
          %s706 = scalar_lea.vmem [#allocation8], %s705
          %708 = dma.done %s703, 128
        $region68: #{tpu_custom_call.1} parent=63 // pred_fallthru
          _
      $region64: #{tpu_custom_call.1} parent=5 // pred_fallthru
        _
    $region6: #{tpu_custom_call.1} parent=1 // loop_footer
      %s23 = sadd.s32 1, %s19
    $region7: #{tpu_custom_call.1} parent=1 // loop_footer_branch
      %18 = sbr.rel target = $region3
    $region8: #{tpu_custom_call.1} parent=1 // loop_exit
      _
    %709 = vsyncpa [#allocation3], 1
    %s710 = scalar_lea.sflag [#allocation3], 1
    %711 = vsyncpa %s710, 1
    %712 = vsyncpa [#allocation6], 1
    %713 = vsyncpa [#allocation4], 1
    %s714 = scalar_lea.sflag [#allocation4], 1
    %715 = vsyncpa %s714, 1

</llo_original>
